<compile_context>
chip_gen: v7x
topology: tpu7x:2x2x1
jax: 0.10.0
libtpu: 0.0.40
codegen_flags: <defaults>
</compile_context>

<pallas_src>
import jax
import jax.numpy as jnp
from jax import lax
from jax.experimental import pallas as pl
from jax.experimental.pallas import tpu as pltpu

_LANES = 128    # accumulator width / per-chunk lane count
_TM_CAP = 128   # max rows per tile (keeps vreg pressure low, >=2 row tiles for big B)


def _vmem_capacity_bytes():
    """Physical per-core VMEM; conservative fallback if the query is unavailable."""
    try:
        cap = getattr(pltpu.get_tpu_info(), "vmem_capacity_bytes", None)
        if cap:
            return int(cap)
    except Exception:
        pass
    return 64 << 20   # v7x per-TensorCore VMEM (smallest current generation)


def _divisor_tile(n, cap, step):
    """Largest multiple of `step` that divides n and is <= cap (None if none)."""
    t = (min(n, cap) // step) * step
    while t >= step:
        if n % t == 0:
            return t
        t -= step
    return None


def _make_kernel(tk, n_chunks, tail, unroll):
    def kernel(x_ref, w_ref, b_ref, o_ref, acc_ref):
        k = pl.program_id(1)

        @pl.when(k == 0)
        def _():
            acc_ref[...] = jnp.zeros_like(acc_ref)

        # Absolute lane offset of this reduction tile inside the resident weight row.
        k_base = k * tk
        if tk % _LANES == 0:
            k_base = pl.multiple_of(k_base, _LANES)

        # VPU-only multiply-accumulate into the (tm, 128) scratch, 128 lanes at a
        # time: bounds vreg live ranges and keeps all XLU work out of the k loop.
        def mac(j, carry):
            off = pl.multiple_of(j * _LANES, _LANES)
            xc = x_ref[:, pl.ds(off, _LANES)].astype(jnp.float32)            # (tm, 128)
            wc = w_ref[:, pl.ds(k_base + off, _LANES)].astype(jnp.float32)   # (1, 128)
            acc_ref[...] += xc * wc
            return carry

        if n_chunks:
            lax.fori_loop(0, n_chunks, mac, 0, unroll=unroll)

        if tail:  # ragged last lanes (only when tk == D and D % 128 != 0); static branch
            off = n_chunks * _LANES
            xc = x_ref[:, pl.ds(off, tail)].astype(jnp.float32)
            wc = w_ref[:, pl.ds(k_base + off, tail)].astype(jnp.float32)
            acc_ref[:, pl.ds(0, tail)] += xc * wc

        # Epilogue: the only XLU work (lane reduce + transpose), bias add, sigmoid.
        @pl.when(k == pl.num_programs(1) - 1)
        def _():
            partial = jnp.sum(acc_ref[...], axis=-1, keepdims=True)   # (tm, 1)
            logits = jnp.transpose(partial) + b_ref[0]                # (1, tm) lane-dense
            o_ref[...] = jax.nn.sigmoid(logits)

    return kernel


def binary_logistic_regression(x, weight, bias, *, tm=None, tk=None):
    """sigmoid(x.reshape(B, -1) @ weight.T + bias). weight: (1, D), bias: (1,). Returns (B, 1)."""
    B = x.shape[0]
    x_flat = x.reshape(B, -1)            # metadata-only for contiguous x; keep native dtype
    D = x_flat.shape[1]
    w_row = weight.reshape(1, D)         # native dtype; cast happens per-chunk in-kernel
    b = jnp.asarray(bias, jnp.float32).reshape(-1)[:1]   # robust to () / (1,) bias

    x_bytes = jnp.dtype(x_flat.dtype).itemsize
    w_bytes = jnp.dtype(w_row.dtype).itemsize

    cap = _vmem_capacity_bytes()
    budget = (cap * 3) // 4              # leave headroom for compiler-internal scratch

    # --- row tile ---
    if tm is None:
        if B <= _TM_CAP:
            tm = B                                        # full-extent block, no pad
        else:
            tm = _divisor_tile(B, _TM_CAP, 8) or _TM_CAP  # fallback pads rows (rare)

    # --- reduction tile: fit double-buffered x tile + resident weight in budget ---
    if tk is None:
        w_resident = 2 * D * w_bytes                      # worst case: 2 buffers kept
        acc_bytes = tm * _LANES * 4
        avail = max(budget - w_resident - acc_bytes - (1 << 20),
                    2 * tm * x_bytes * _LANES)
        tk_cap = max(_LANES, min(avail // (2 * tm * x_bytes), 1 << 22))
        if D <= tk_cap:
            tk = D                                        # single k step, no pad
        else:
            tk = _divisor_tile(D, tk_cap, _LANES)
            if tk is None:
                # TODO(synk): pathological D with no 128-multiple divisor under the
                # VMEM budget — fall back to zero-padding the feature axis.
                tk = (tk_cap // _LANES) * _LANES

    # Pad only in the rare fallback cases above (common path: zero extra HBM copies).
    Bp = pl.cdiv(B, tm) * tm
    Dp = pl.cdiv(D, tk) * tk
    if (Bp, Dp) != (B, D):
        x_flat = jnp.pad(x_flat, ((0, Bp - B), (0, Dp - D)))
        if Dp != D:
            w_row = jnp.pad(w_row, ((0, 0), (0, Dp - D)))

    n_chunks, tail = divmod(tk, _LANES)
    unroll = True if n_chunks <= 16 else 8

    footprint = (2 * tm * tk * x_bytes     # double-buffered x stream
                 + 2 * Dp * w_bytes        # resident weight row
                 + 4 * tm * 4              # output buffers
                 + tm * _LANES * 4)        # accumulator scratch
    vmem_limit = int(min(cap, max(footprint + (8 << 20), 32 << 20)))

    out = pl.pallas_call(
        _make_kernel(tk, n_chunks, tail, unroll),
        out_shape=jax.ShapeDtypeStruct((1, Bp), jnp.float32),   # lane-dense probs
        grid_spec=pltpu.PrefetchScalarGridSpec(
            num_scalar_prefetch=0,
            grid=(Bp // tm, Dp // tk),
            in_specs=[
                pl.BlockSpec((tm, tk), lambda i, k: (i, k)),          # x tile (native dtype)
                pl.BlockSpec((1, Dp), lambda i, k: (0, 0)),           # weight row, VMEM-resident
                pl.BlockSpec(memory_space=pltpu.MemorySpace.SMEM),    # bias scalar in SMEM
            ],
            out_specs=pl.BlockSpec((1, tm), lambda i, k: (0, i)),     # resident across k
            scratch_shapes=[pltpu.VMEM((tm, _LANES), jnp.float32)],   # f32 accumulator
        ),
        compiler_params=pltpu.CompilerParams(
            dimension_semantics=("parallel", "arbitrary"),
            vmem_limit_bytes=vmem_limit,
        ),
    )(x_flat, w_row, b)

    # Back to the module's (B, 1) layout; drop any (fallback-only) row padding.
    return out[0, :B].reshape(B, 1)


if __name__ == "__main__":
    # Shapes consistent with the module: input_size = (B, C, H, W) = (2, 4, 16, 16)
    B, C, H, W = 2, 4, 16, 16
    D = C * H * W  # 1024

    key = jax.random.PRNGKey(0)
    kx, kw = jax.random.split(key)

    x = jax.random.normal(kx, (B, C, H, W), dtype=jnp.float32)
    # nn.init.uniform_(weight, -0.01, 0.01); bias = zeros
    weight = jax.random.uniform(kw, (1, D), dtype=jnp.float32,
                                minval=-0.01, maxval=0.01)
    bias = jnp.zeros((1,), dtype=jnp.float32)

    out = binary_logistic_regression(x, weight, bias)
    out = jax.block_until_ready(out)

    # Reference in plain JAX (matches the PyTorch forward).
    x_flat = x.reshape(B, -1)
    ref = jax.nn.sigmoid(x_flat @ weight.T + bias)
    assert out.shape == (B, 1)
    assert jnp.allclose(out, ref, atol=1e-6, rtol=1e-6)

    print("KERNEL_OK")
</pallas_src>

<mosaic_0001>
module attributes {stable_mosaic.version = 11 : i64} {
  func.func @kernel(%arg0: i32, %arg1: i32, %arg2: memref<2x1024xf32, #tpu.memory_space<vmem>>, %arg3: memref<1x1024xf32, #tpu.memory_space<vmem>>, %arg4: memref<1xf32, #tpu.memory_space<smem>>, %arg5: memref<1x2xf32, #tpu.memory_space<vmem>>, %arg6: memref<2x128xf32, #tpu.memory_space<vmem>>) attributes {dimension_semantics = [#tpu.dimension_semantics<parallel>, #tpu.dimension_semantics<arbitrary>], iteration_bounds = array<i64: 1, 1>, scalar_prefetch = 0 : i64, scratch_operands = 1 : i64, tpu.core_type = #tpu.core_type<tc>, window_params = [{transform_indices = @transform_0, window_bounds = array<i64: 2, 1024>}, {pipeline_mode = #tpu.pipeline_mode<synchronous>, transform_indices = @transform_1, window_bounds = array<i64: 1, 1024>}, {transform_indices = @transform_2, window_bounds = array<i64: 1>}, {transform_indices = @transform_3, window_bounds = array<i64: 1, 2>}]} {
    %c0_i32 = arith.constant 0 : i32
    %0 = arith.cmpi eq, %arg1, %c0_i32 : i32
    %1 = arith.extui %0 : i1 to i32
    %c0_i32_0 = arith.constant 0 : i32
    %2 = arith.cmpi ne, %1, %c0_i32_0 : i32
    scf.if %2 {
      %cst = arith.constant 0.000000e+00 : f32
      %104 = vector.broadcast %cst : f32 to vector<2x128xf32>
      %c0_58 = arith.constant 0 : index
      %c0_59 = arith.constant 0 : index
      %105 = vector.load %arg6[%c0_58, %c0_59] : memref<2x128xf32, #tpu.memory_space<vmem>>, vector<2x128xf32>
      tpu.vector_store %arg6[%c0_58, %c0_59], %104 {strides = array<i32>} : memref<2x128xf32, #tpu.memory_space<vmem>>, vector<2x128xf32>,
    } else {
    }
    %c1024_i32 = arith.constant 1024 : i32
    %3 = arith.muli %arg1, %c1024_i32 : i32
    %4 = tpu.assume_multiple %3, 128 : i32
    %c0_i32_1 = arith.constant 0 : i32
    %c128_i32 = arith.constant 128 : i32
    %5 = arith.muli %c0_i32_1, %c128_i32 : i32
    %6 = tpu.assume_multiple %5, 128 : i32
    %c0 = arith.constant 0 : index
    %7 = arith.index_cast %6 : i32 to index
    %8 = vector.load %arg2[%c0, %7] : memref<2x1024xf32, #tpu.memory_space<vmem>>, vector<2x128xf32>
    %9 = arith.addi %4, %6 : i32
    %c0_2 = arith.constant 0 : index
    %10 = arith.index_cast %9 : i32 to index
    %11 = vector.load %arg3[%c0_2, %10] : memref<1x1024xf32, #tpu.memory_space<vmem>>, vector<1x128xf32>
    %c0_3 = arith.constant 0 : index
    %c0_4 = arith.constant 0 : index
    %12 = vector.load %arg6[%c0_3, %c0_4] : memref<2x128xf32, #tpu.memory_space<vmem>>, vector<2x128xf32>
    %13 = vector.broadcast %11 : vector<1x128xf32> to vector<2x128xf32>
    %14 = arith.mulf %8, %13 : vector<2x128xf32>
    %15 = arith.addf %12, %14 : vector<2x128xf32>
    %c0_5 = arith.constant 0 : index
    %c0_6 = arith.constant 0 : index
    %16 = vector.load %arg6[%c0_5, %c0_6] : memref<2x128xf32, #tpu.memory_space<vmem>>, vector<2x128xf32>
    tpu.vector_store %arg6[%c0_5, %c0_6], %15 {strides = array<i32>} : memref<2x128xf32, #tpu.memory_space<vmem>>, vector<2x128xf32>,
    %c1_i32 = arith.constant 1 : i32
    %c128_i32_7 = arith.constant 128 : i32
    %17 = arith.muli %c1_i32, %c128_i32_7 : i32
    %18 = tpu.assume_multiple %17, 128 : i32
    %c0_8 = arith.constant 0 : index
    %19 = arith.index_cast %18 : i32 to index
    %20 = vector.load %arg2[%c0_8, %19] : memref<2x1024xf32, #tpu.memory_space<vmem>>, vector<2x128xf32>
    %21 = arith.addi %4, %18 : i32
    %c0_9 = arith.constant 0 : index
    %22 = arith.index_cast %21 : i32 to index
    %23 = vector.load %arg3[%c0_9, %22] : memref<1x1024xf32, #tpu.memory_space<vmem>>, vector<1x128xf32>
    %c0_10 = arith.constant 0 : index
    %c0_11 = arith.constant 0 : index
    %24 = vector.load %arg6[%c0_10, %c0_11] : memref<2x128xf32, #tpu.memory_space<vmem>>, vector<2x128xf32>
    %25 = vector.broadcast %23 : vector<1x128xf32> to vector<2x128xf32>
    %26 = arith.mulf %20, %25 : vector<2x128xf32>
    %27 = arith.addf %24, %26 : vector<2x128xf32>
    %c0_12 = arith.constant 0 : index
    %c0_13 = arith.constant 0 : index
    %28 = vector.load %arg6[%c0_12, %c0_13] : memref<2x128xf32, #tpu.memory_space<vmem>>, vector<2x128xf32>
    tpu.vector_store %arg6[%c0_12, %c0_13], %27 {strides = array<i32>} : memref<2x128xf32, #tpu.memory_space<vmem>>, vector<2x128xf32>,
    %c2_i32 = arith.constant 2 : i32
    %c128_i32_14 = arith.constant 128 : i32
    %29 = arith.muli %c2_i32, %c128_i32_14 : i32
    %30 = tpu.assume_multiple %29, 128 : i32
    %c0_15 = arith.constant 0 : index
    %31 = arith.index_cast %30 : i32 to index
    %32 = vector.load %arg2[%c0_15, %31] : memref<2x1024xf32, #tpu.memory_space<vmem>>, vector<2x128xf32>
    %33 = arith.addi %4, %30 : i32
    %c0_16 = arith.constant 0 : index
    %34 = arith.index_cast %33 : i32 to index
    %35 = vector.load %arg3[%c0_16, %34] : memref<1x1024xf32, #tpu.memory_space<vmem>>, vector<1x128xf32>
    %c0_17 = arith.constant 0 : index
    %c0_18 = arith.constant 0 : index
    %36 = vector.load %arg6[%c0_17, %c0_18] : memref<2x128xf32, #tpu.memory_space<vmem>>, vector<2x128xf32>
    %37 = vector.broadcast %35 : vector<1x128xf32> to vector<2x128xf32>
    %38 = arith.mulf %32, %37 : vector<2x128xf32>
    %39 = arith.addf %36, %38 : vector<2x128xf32>
    %c0_19 = arith.constant 0 : index
    %c0_20 = arith.constant 0 : index
    %40 = vector.load %arg6[%c0_19, %c0_20] : memref<2x128xf32, #tpu.memory_space<vmem>>, vector<2x128xf32>
    tpu.vector_store %arg6[%c0_19, %c0_20], %39 {strides = array<i32>} : memref<2x128xf32, #tpu.memory_space<vmem>>, vector<2x128xf32>,
    %c3_i32 = arith.constant 3 : i32
    %c128_i32_21 = arith.constant 128 : i32
    %41 = arith.muli %c3_i32, %c128_i32_21 : i32
    %42 = tpu.assume_multiple %41, 128 : i32
    %c0_22 = arith.constant 0 : index
    %43 = arith.index_cast %42 : i32 to index
    %44 = vector.load %arg2[%c0_22, %43] : memref<2x1024xf32, #tpu.memory_space<vmem>>, vector<2x128xf32>
    %45 = arith.addi %4, %42 : i32
    %c0_23 = arith.constant 0 : index
    %46 = arith.index_cast %45 : i32 to index
    %47 = vector.load %arg3[%c0_23, %46] : memref<1x1024xf32, #tpu.memory_space<vmem>>, vector<1x128xf32>
    %c0_24 = arith.constant 0 : index
    %c0_25 = arith.constant 0 : index
    %48 = vector.load %arg6[%c0_24, %c0_25] : memref<2x128xf32, #tpu.memory_space<vmem>>, vector<2x128xf32>
    %49 = vector.broadcast %47 : vector<1x128xf32> to vector<2x128xf32>
    %50 = arith.mulf %44, %49 : vector<2x128xf32>
    %51 = arith.addf %48, %50 : vector<2x128xf32>
    %c0_26 = arith.constant 0 : index
    %c0_27 = arith.constant 0 : index
    %52 = vector.load %arg6[%c0_26, %c0_27] : memref<2x128xf32, #tpu.memory_space<vmem>>, vector<2x128xf32>
    tpu.vector_store %arg6[%c0_26, %c0_27], %51 {strides = array<i32>} : memref<2x128xf32, #tpu.memory_space<vmem>>, vector<2x128xf32>,
    %c4_i32 = arith.constant 4 : i32
    %c128_i32_28 = arith.constant 128 : i32
    %53 = arith.muli %c4_i32, %c128_i32_28 : i32
    %54 = tpu.assume_multiple %53, 128 : i32
    %c0_29 = arith.constant 0 : index
    %55 = arith.index_cast %54 : i32 to index
    %56 = vector.load %arg2[%c0_29, %55] : memref<2x1024xf32, #tpu.memory_space<vmem>>, vector<2x128xf32>
    %57 = arith.addi %4, %54 : i32
    %c0_30 = arith.constant 0 : index
    %58 = arith.index_cast %57 : i32 to index
    %59 = vector.load %arg3[%c0_30, %58] : memref<1x1024xf32, #tpu.memory_space<vmem>>, vector<1x128xf32>
    %c0_31 = arith.constant 0 : index
    %c0_32 = arith.constant 0 : index
    %60 = vector.load %arg6[%c0_31, %c0_32] : memref<2x128xf32, #tpu.memory_space<vmem>>, vector<2x128xf32>
    %61 = vector.broadcast %59 : vector<1x128xf32> to vector<2x128xf32>
    %62 = arith.mulf %56, %61 : vector<2x128xf32>
    %63 = arith.addf %60, %62 : vector<2x128xf32>
    %c0_33 = arith.constant 0 : index
    %c0_34 = arith.constant 0 : index
    %64 = vector.load %arg6[%c0_33, %c0_34] : memref<2x128xf32, #tpu.memory_space<vmem>>, vector<2x128xf32>
    tpu.vector_store %arg6[%c0_33, %c0_34], %63 {strides = array<i32>} : memref<2x128xf32, #tpu.memory_space<vmem>>, vector<2x128xf32>,
    %c5_i32 = arith.constant 5 : i32
    %c128_i32_35 = arith.constant 128 : i32
    %65 = arith.muli %c5_i32, %c128_i32_35 : i32
    %66 = tpu.assume_multiple %65, 128 : i32
    %c0_36 = arith.constant 0 : index
    %67 = arith.index_cast %66 : i32 to index
    %68 = vector.load %arg2[%c0_36, %67] : memref<2x1024xf32, #tpu.memory_space<vmem>>, vector<2x128xf32>
    %69 = arith.addi %4, %66 : i32
    %c0_37 = arith.constant 0 : index
    %70 = arith.index_cast %69 : i32 to index
    %71 = vector.load %arg3[%c0_37, %70] : memref<1x1024xf32, #tpu.memory_space<vmem>>, vector<1x128xf32>
    %c0_38 = arith.constant 0 : index
    %c0_39 = arith.constant 0 : index
    %72 = vector.load %arg6[%c0_38, %c0_39] : memref<2x128xf32, #tpu.memory_space<vmem>>, vector<2x128xf32>
    %73 = vector.broadcast %71 : vector<1x128xf32> to vector<2x128xf32>
    %74 = arith.mulf %68, %73 : vector<2x128xf32>
    %75 = arith.addf %72, %74 : vector<2x128xf32>
    %c0_40 = arith.constant 0 : index
    %c0_41 = arith.constant 0 : index
    %76 = vector.load %arg6[%c0_40, %c0_41] : memref<2x128xf32, #tpu.memory_space<vmem>>, vector<2x128xf32>
    tpu.vector_store %arg6[%c0_40, %c0_41], %75 {strides = array<i32>} : memref<2x128xf32, #tpu.memory_space<vmem>>, vector<2x128xf32>,
    %c6_i32 = arith.constant 6 : i32
    %c128_i32_42 = arith.constant 128 : i32
    %77 = arith.muli %c6_i32, %c128_i32_42 : i32
    %78 = tpu.assume_multiple %77, 128 : i32
    %c0_43 = arith.constant 0 : index
    %79 = arith.index_cast %78 : i32 to index
    %80 = vector.load %arg2[%c0_43, %79] : memref<2x1024xf32, #tpu.memory_space<vmem>>, vector<2x128xf32>
    %81 = arith.addi %4, %78 : i32
    %c0_44 = arith.constant 0 : index
    %82 = arith.index_cast %81 : i32 to index
    %83 = vector.load %arg3[%c0_44, %82] : memref<1x1024xf32, #tpu.memory_space<vmem>>, vector<1x128xf32>
    %c0_45 = arith.constant 0 : index
    %c0_46 = arith.constant 0 : index
    %84 = vector.load %arg6[%c0_45, %c0_46] : memref<2x128xf32, #tpu.memory_space<vmem>>, vector<2x128xf32>
    %85 = vector.broadcast %83 : vector<1x128xf32> to vector<2x128xf32>
    %86 = arith.mulf %80, %85 : vector<2x128xf32>
    %87 = arith.addf %84, %86 : vector<2x128xf32>
    %c0_47 = arith.constant 0 : index
    %c0_48 = arith.constant 0 : index
    %88 = vector.load %arg6[%c0_47, %c0_48] : memref<2x128xf32, #tpu.memory_space<vmem>>, vector<2x128xf32>
    tpu.vector_store %arg6[%c0_47, %c0_48], %87 {strides = array<i32>} : memref<2x128xf32, #tpu.memory_space<vmem>>, vector<2x128xf32>,
    %c7_i32 = arith.constant 7 : i32
    %c128_i32_49 = arith.constant 128 : i32
    %89 = arith.muli %c7_i32, %c128_i32_49 : i32
    %90 = tpu.assume_multiple %89, 128 : i32
    %c0_50 = arith.constant 0 : index
    %91 = arith.index_cast %90 : i32 to index
    %92 = vector.load %arg2[%c0_50, %91] : memref<2x1024xf32, #tpu.memory_space<vmem>>, vector<2x128xf32>
    %93 = arith.addi %4, %90 : i32
    %c0_51 = arith.constant 0 : index
    %94 = arith.index_cast %93 : i32 to index
    %95 = vector.load %arg3[%c0_51, %94] : memref<1x1024xf32, #tpu.memory_space<vmem>>, vector<1x128xf32>
    %c0_52 = arith.constant 0 : index
    %c0_53 = arith.constant 0 : index
    %96 = vector.load %arg6[%c0_52, %c0_53] : memref<2x128xf32, #tpu.memory_space<vmem>>, vector<2x128xf32>
    %97 = vector.broadcast %95 : vector<1x128xf32> to vector<2x128xf32>
    %98 = arith.mulf %92, %97 : vector<2x128xf32>
    %99 = arith.addf %96, %98 : vector<2x128xf32>
    %c0_54 = arith.constant 0 : index
    %c0_55 = arith.constant 0 : index
    %100 = vector.load %arg6[%c0_54, %c0_55] : memref<2x128xf32, #tpu.memory_space<vmem>>, vector<2x128xf32>
    tpu.vector_store %arg6[%c0_54, %c0_55], %99 {strides = array<i32>} : memref<2x128xf32, #tpu.memory_space<vmem>>, vector<2x128xf32>,
    %c8_i32 = arith.constant 8 : i32
    %c0_i32_56 = arith.constant 0 : i32
    %101 = arith.cmpi eq, %arg1, %c0_i32_56 : i32
    %102 = arith.extui %101 : i1 to i32
    %c0_i32_57 = arith.constant 0 : i32
    %103 = arith.cmpi ne, %102, %c0_i32_57 : i32
    scf.if %103 {
      %c0_58 = arith.constant 0 : index
      %c0_59 = arith.constant 0 : index
      %104 = vector.load %arg6[%c0_58, %c0_59] : memref<2x128xf32, #tpu.memory_space<vmem>>, vector<2x128xf32>
      %cst = arith.constant dense<0.000000e+00> : vector<2xf32>
      %105 = vector.multi_reduction <add>, %104, %cst [1] : vector<2x128xf32> to vector<2xf32>
      %106 = vector.shape_cast %105 : vector<2xf32> to vector<2x1xf32>
      %107 = tpu.transpose %106, [1, 0] : vector<2x1xf32> -> vector<1x2xf32>
      %c0_60 = arith.constant 0 : index
      %108 = memref.load %arg4[%c0_60] : memref<1xf32, #tpu.memory_space<smem>>
      %109 = vector.broadcast %108 : f32 to vector<1x2xf32>
      %110 = arith.addf %107, %109 : vector<1x2xf32>
      %111 = arith.negf %110 : vector<1x2xf32>
      %112 = math.exp %111 : vector<1x2xf32>
      %cst_61 = arith.constant 1.000000e+00 : f32
      %113 = vector.broadcast %cst_61 : f32 to vector<1x2xf32>
      %114 = arith.addf %113, %112 : vector<1x2xf32>
      %115 = arith.divf %113, %114 : vector<1x2xf32>
      %c0_62 = arith.constant 0 : index
      %c0_63 = arith.constant 0 : index
      %116 = vector.load %arg5[%c0_62, %c0_63] : memref<1x2xf32, #tpu.memory_space<vmem>>, vector<1x2xf32>
      tpu.vector_store %arg5[%c0_62, %c0_63], %115 {strides = array<i32>} : memref<1x2xf32, #tpu.memory_space<vmem>>, vector<1x2xf32>,
    } else {
    }
    return
  }
  func.func @transform_0(%arg0: i32, %arg1: i32) -> (i32, i32) {
    %c0_i32 = arith.constant 0 : i32
    return %arg0, %arg1 : i32, i32
  }
  func.func @transform_1(%arg0: i32, %arg1: i32) -> (i32, i32) {
    %c0_i32 = arith.constant 0 : i32
    %c0_i32_0 = arith.constant 0 : i32
    %c0_i32_1 = arith.constant 0 : i32
    return %c0_i32, %c0_i32_0 : i32, i32
  }
  func.func @transform_2(%arg0: i32, %arg1: i32) -> i32 {
    %c0_i32 = arith.constant 0 : i32
    %c0_i32_0 = arith.constant 0 : i32
    return %c0_i32 : i32
  }
  func.func @transform_3(%arg0: i32, %arg1: i32) -> (i32, i32) {
    %c0_i32 = arith.constant 0 : i32
    %c0_i32_0 = arith.constant 0 : i32
    return %c0_i32, %arg0 : i32, i32
  }
}

</mosaic_0001>

<llo_original>
// kernel: tpu_custom_call.1
$region0: #{tpu_custom_call.1}
  #allocation0 [shape = 'u32[]', space=smem, size = 0x4, offset = 0x4, fixed_abs, tag = 'smem constant byte address 0x4 - core index']
  #allocation1 [shape = 'u32[144,128]{1,0:T(1,128)}', space=vmem, size = 0x12000, scoped, tag = 'internal scratch']
  #allocation2 [shape = 'f32[2,128]{1,0:T(2,128)}', space=vmem, size = 0x400, scoped, tag = 'scratch operand']
  #allocation3 [shape = 'f32[1]{0:T(128)S(6)}', space=smem, size = 0x200, scoped, tag = 'scoped memory for tpu_custom_call.1']
  %s0 = inlined_call_operand.hbm [shape: f32[2,1024], index: 0, kind: input, shape index: {}]
  %s1 = inlined_call_operand.hbm [shape: f32[1,1024], index: 1, kind: input, shape index: {}]
  %s2 = inlined_call_operand.<no memory space> [shape: f32[1], index: 2, kind: input, shape index: {}]
  %s3 = inlined_call_operand.hbm [shape: f32[1,2], index: 3, kind: output, shape index: {}]
  %s4 = sld [smem:[#allocation0]]
  $region38: #{tpu_custom_call.1} parent=0
    _
  %s6 = ssub.s32 1, %s4
  %s7 = scalar_select 0, %s6, %s4
  %8 = sst [smem:[#allocation3]] %s2
  $region1: #{tpu_custom_call.1} parent=0
    #allocation4 [shape = 'u8[8192]{0}', space=vmem, size = 0x2000, scoped, tag = 'input window, operand 0, single buffered']
    #allocation5 [shape = 's32[1]{0}', space=sflag, size = 0x4, scoped, tag = 'scoped memory for tpu_custom_call.1']
    #allocation6 [shape = 's32[1]{0}', space=sflag, size = 0x4, scoped, tag = 'scoped memory for tpu_custom_call.1']
    #allocation7 [shape = 'u8[4096]{0}', space=vmem, size = 0x1000, scoped, tag = 'input window, operand 1, single buffered']
    #allocation8 [shape = 's32[1]{0}', space=sflag, size = 0x4, scoped, tag = 'scoped memory for tpu_custom_call.1']
    #allocation9 [shape = 'u8[512]{0}', space=vmem, size = 0x400, scoped, tag = 'output window, operand 0, single buffered']
    %9 = vsyncpa [#allocation5], 0
    %10 = vsyncpa [#allocation8], 0
    %11 = vsyncpa [#allocation6], 0
    // Predicated region
    $region2: #{tpu_custom_call.1} parent=1 // pred_check
      _
    $region3: #{tpu_custom_call.1} parent=1 // pred_check_branch
      %13 = sbr.rel (0) target = $region5
    $region4: #{tpu_custom_call.1} parent=1 // pred_region
      %s15 = ssub.s32 256, 256
      %16 = vsyncadd [#allocation5], %s15
      %s18 = sshll.u32 [#allocation4], 4
      %s19 = int_to_ptr.vmem [resolvable:$true] %s18
      %21 = dma.hbm_to_vmem [thread:$0]  %s0, 256, %s19, [#allocation5]
    $region5: #{tpu_custom_call.1} parent=1 // pred_fallthru
      _
    // Predicated region
    $region6: #{tpu_custom_call.1} parent=1 // pred_check
      _
    $region7: #{tpu_custom_call.1} parent=1 // pred_check_branch
      %23 = sbr.rel (0) target = $region9
    $region8: #{tpu_custom_call.1} parent=1 // pred_region
      %s25 = ssub.s32 128, 128
      %26 = vsyncadd [#allocation8], %s25
      %s28 = sshll.u32 [#allocation7], 4
      %s29 = int_to_ptr.vmem [resolvable:$true] %s28
      %31 = dma.hbm_to_vmem [thread:$0]  %s1, 128, %s29, [#allocation8]
    $region9: #{tpu_custom_call.1} parent=1 // pred_fallthru
      _
    // Predicated region
    $region10: #{tpu_custom_call.1} parent=1 // pred_check
      _
    $region11: #{tpu_custom_call.1} parent=1 // pred_check_branch
      %33 = sbr.rel (0) target = $region13
    $region12: #{tpu_custom_call.1} parent=1 // pred_region
      _
    $region13: #{tpu_custom_call.1} parent=1 // pred_fallthru
      _
    // Predicated region
    $region14: #{tpu_custom_call.1} parent=1 // pred_check
      _
    $region15: #{tpu_custom_call.1} parent=1 // pred_check_branch
      %35 = sbr.rel (0) target = $region17
    $region16: #{tpu_custom_call.1} parent=1 // pred_region
      %36 = dma.done [#allocation5], 256
    $region17: #{tpu_custom_call.1} parent=1 // pred_fallthru
      _
    // Predicated region
    $region18: #{tpu_custom_call.1} parent=1 // pred_check
      _
    $region19: #{tpu_custom_call.1} parent=1 // pred_check_branch
      %38 = sbr.rel (0) target = $region21
    $region20: #{tpu_custom_call.1} parent=1 // pred_region
      %39 = dma.done [#allocation8], 128
    $region21: #{tpu_custom_call.1} parent=1 // pred_fallthru
      _
    %p40 = scmp.eq.s32.totalorder 0, 0
    // Predicated region
    $region22: #{tpu_custom_call.1} parent=1 // pred_check
      %p41 = pneg %p40
    $region23: #{tpu_custom_call.1} parent=1 // pred_check_branch
      %43 = sbr.rel (%p41) target = $region25
    $region24: #{tpu_custom_call.1} parent=1 // pred_region
      %44 = vst [vmem:[#allocation2] sm:$0x3] 0.0
    $region25: #{tpu_custom_call.1} parent=1 // pred_fallthru
      _
    %s45 = smul.u32 0, 1024
    %v46 = vld [vmem:[#allocation4] sm:$0x3]
    %s47 = sadd.s32 %s45, 0
    %s48 = sshra.s32 %s47, 7
    %s49 = sand.u32 %s47, 127
    %s50 = scalar_lea.vmem [#allocation7], %s48
    %v51 = vld [vmem:[%s50] sm:$0x1]
    %v52 = vld [vmem:[#allocation2] sm:$0x3]
    %v54 = vlaneseq
    %v55 = vshrl.u32 %v54, 7
    %v56 = vsub.s32 0, %v55
    %v57 = vrot.slane %v51, %v56
    %v59 = vmul.f32 %v46, %v57
    %v60 = vadd.f32 %v52, %v59
    %61 = vst [vmem:[#allocation2] sm:$0x3] %v60
    %s62 = scalar_lea.vmem [#allocation4], 2
    %v63 = vld [vmem:[%s62] sm:$0x3]
    %s64 = sadd.s32 %s45, 128
    %s65 = sshra.s32 %s64, 7
    %s66 = sand.u32 %s64, 127
    %s67 = scalar_lea.vmem [#allocation7], %s65
    %v68 = vld [vmem:[%s67] sm:$0x1]
    %v69 = vld [vmem:[#allocation2] sm:$0x3]
    %v71 = vlaneseq
    %v72 = vshrl.u32 %v71, 7
    %v73 = vsub.s32 0, %v72
    %v74 = vrot.slane %v68, %v73
    %v76 = vmul.f32 %v63, %v74
    %v77 = vadd.f32 %v69, %v76
    %78 = vst [vmem:[#allocation2] sm:$0x3] %v77
    %s79 = scalar_lea.vmem [#allocation4], 4
    %v80 = vld [vmem:[%s79] sm:$0x3]
    %s81 = sadd.s32 %s45, 256
    %s82 = sshra.s32 %s81, 7
    %s83 = sand.u32 %s81, 127
    %s84 = scalar_lea.vmem [#allocation7], %s82
    %v85 = vld [vmem:[%s84] sm:$0x1]
    %v86 = vld [vmem:[#allocation2] sm:$0x3]
    %v88 = vlaneseq
    %v89 = vshrl.u32 %v88, 7
    %v90 = vsub.s32 0, %v89
    %v91 = vrot.slane %v85, %v90
    %v93 = vmul.f32 %v80, %v91
    %v94 = vadd.f32 %v86, %v93
    %95 = vst [vmem:[#allocation2] sm:$0x3] %v94
    %s96 = scalar_lea.vmem [#allocation4], 6
    %v97 = vld [vmem:[%s96] sm:$0x3]
    %s98 = sadd.s32 %s45, 384
    %s99 = sshra.s32 %s98, 7
    %s100 = sand.u32 %s98, 127
    %s101 = scalar_lea.vmem [#allocation7], %s99
    %v102 = vld [vmem:[%s101] sm:$0x1]
    %v103 = vld [vmem:[#allocation2] sm:$0x3]
    %v105 = vlaneseq
    %v106 = vshrl.u32 %v105, 7
    %v107 = vsub.s32 0, %v106
    %v108 = vrot.slane %v102, %v107
    %v110 = vmul.f32 %v97, %v108
    %v111 = vadd.f32 %v103, %v110
    %112 = vst [vmem:[#allocation2] sm:$0x3] %v111
    %s113 = scalar_lea.vmem [#allocation4], 8
    %v114 = vld [vmem:[%s113] sm:$0x3]
    %s115 = sadd.s32 %s45, 512
    %s116 = sshra.s32 %s115, 7
    %s117 = sand.u32 %s115, 127
    %s118 = scalar_lea.vmem [#allocation7], %s116
    %v119 = vld [vmem:[%s118] sm:$0x1]
    %v120 = vld [vmem:[#allocation2] sm:$0x3]
    %v122 = vlaneseq
    %v123 = vshrl.u32 %v122, 7
    %v124 = vsub.s32 0, %v123
    %v125 = vrot.slane %v119, %v124
    %v127 = vmul.f32 %v114, %v125
    %v128 = vadd.f32 %v120, %v127
    %129 = vst [vmem:[#allocation2] sm:$0x3] %v128
    %s130 = scalar_lea.vmem [#allocation4], 10
    %v131 = vld [vmem:[%s130] sm:$0x3]
    %s132 = sadd.s32 %s45, 640
    %s133 = sshra.s32 %s132, 7
    %s134 = sand.u32 %s132, 127
    %s135 = scalar_lea.vmem [#allocation7], %s133
    %v136 = vld [vmem:[%s135] sm:$0x1]
    %v137 = vld [vmem:[#allocation2] sm:$0x3]
    %v139 = vlaneseq
    %v140 = vshrl.u32 %v139, 7
    %v141 = vsub.s32 0, %v140
    %v142 = vrot.slane %v136, %v141
    %v144 = vmul.f32 %v131, %v142
    %v145 = vadd.f32 %v137, %v144
    %146 = vst [vmem:[#allocation2] sm:$0x3] %v145
    %s147 = scalar_lea.vmem [#allocation4], 12
    %v148 = vld [vmem:[%s147] sm:$0x3]
    %s149 = sadd.s32 %s45, 768
    %s150 = sshra.s32 %s149, 7
    %s151 = sand.u32 %s149, 127
    %s152 = scalar_lea.vmem [#allocation7], %s150
    %v153 = vld [vmem:[%s152] sm:$0x1]
    %v154 = vld [vmem:[#allocation2] sm:$0x3]
    %v156 = vlaneseq
    %v157 = vshrl.u32 %v156, 7
    %v158 = vsub.s32 0, %v157
    %v159 = vrot.slane %v153, %v158
    %v161 = vmul.f32 %v148, %v159
    %v162 = vadd.f32 %v154, %v161
    %163 = vst [vmem:[#allocation2] sm:$0x3] %v162
    %s164 = scalar_lea.vmem [#allocation4], 14
    %v165 = vld [vmem:[%s164] sm:$0x3]
    %s166 = sadd.s32 %s45, 896
    %s167 = sshra.s32 %s166, 7
    %s168 = sand.u32 %s166, 127
    %s169 = scalar_lea.vmem [#allocation7], %s167
    %v170 = vld [vmem:[%s169] sm:$0x1]
    %v171 = vld [vmem:[#allocation2] sm:$0x3]
    %v173 = vlaneseq
    %v174 = vshrl.u32 %v173, 7
    %v175 = vsub.s32 0, %v174
    %v176 = vrot.slane %v170, %v175
    %v178 = vmul.f32 %v165, %v176
    %v179 = vadd.f32 %v171, %v178
    %180 = vst [vmem:[#allocation2] sm:$0x3] %v179
    // Predicated region
    $region26: #{tpu_custom_call.1} parent=1 // pred_check
      %p181 = pneg %p40
    $region27: #{tpu_custom_call.1} parent=1 // pred_check_branch
      %183 = sbr.rel (%p181) target = $region29
    $region28: #{tpu_custom_call.1} parent=1 // pred_region
      %v184 = vld [vmem:[#allocation2] sm:$0x3]
      %vm185 = vcmask 1041408
      %v186 = vsel %vm185, %v184, 0.0
      %187 = vadd.xlane.f32.xlu0 %v186
      %v188 = vpop.xlane.xlu0 %187
      %189 = vxpose.xlu0.b32.start [1/16] %v188, 128
      %190 = vxpose.xlu0.b32.cont [2/16] 0.0, 128
      %191 = vxpose.xlu0.b32.cont [3/16] 0.0, 128
      %192 = vxpose.xlu0.b32.cont [4/16] 0.0, 128
      %193 = vxpose.xlu0.b32.cont [5/16] 0.0, 128
      %194 = vxpose.xlu0.b32.cont [6/16] 0.0, 128
      %195 = vxpose.xlu0.b32.cont [7/16] 0.0, 128
      %196 = vxpose.xlu0.b32.cont [8/16] 0.0, 128
      %197 = vxpose.xlu0.b32.cont [9/16] 0.0, 128
      %198 = vxpose.xlu0.b32.cont [10/16] 0.0, 128
      %199 = vxpose.xlu0.b32.cont [11/16] 0.0, 128
      %200 = vxpose.xlu0.b32.cont [12/16] 0.0, 128
      %201 = vxpose.xlu0.b32.cont [13/16] 0.0, 128
      %202 = vxpose.xlu0.b32.cont [14/16] 0.0, 128
      %203 = vxpose.xlu0.b32.cont [15/16] 0.0, 128
      %204 = vxpose.xlu0.b32.end [16/16] 0.0, 128
      %v205 = vpop.trf.xlu0
      %v206 = vpop.trf.xlu0
      %v207 = vpop.trf.xlu0
      %v208 = vpop.trf.xlu0
      %v209 = vpop.trf.xlu0
      %v210 = vpop.trf.xlu0
      %v211 = vpop.trf.xlu0
      %v212 = vpop.trf.xlu0
      %v213 = vpop.trf.xlu0
      %v214 = vpop.trf.xlu0
      %v215 = vpop.trf.xlu0
      %v216 = vpop.trf.xlu0
      %v217 = vpop.trf.xlu0
      %v218 = vpop.trf.xlu0
      %v219 = vpop.trf.xlu0
      %v220 = vpop.trf.xlu0
      %s221 = sld [smem:[#allocation3]]
      %v222 = vstv %s221
      %v223 = vadd.f32 %v205, %v222
      %v224 = vxor.u32 %v223, 2147483648
      %v225 = vmul.f32 %v224, 1.442695
      %v226 = vpow.pop %v225
      %v227 = vadd.f32 %v226, 1.0
      %v228 = vrcp.pop %v227
      %v229 = vmul.f32 1.0, %v228
      %vm230 = vcmask 8192
      %231 = vst.msk [vmem:[#allocation9] sm:$0x1] %vm230, %v229
    $region29: #{tpu_custom_call.1} parent=1 // pred_fallthru
      _
    // Predicated region
    $region30: #{tpu_custom_call.1} parent=1 // pred_check
      _
    $region31: #{tpu_custom_call.1} parent=1 // pred_check_branch
      %233 = sbr.rel (0) target = $region33
    $region32: #{tpu_custom_call.1} parent=1 // pred_region
      %s235 = ssub.s32 16, 16
      %236 = vsyncadd [#allocation6], %s235
      %s238 = sshll.u32 [#allocation9], 4
      %s239 = int_to_ptr.vmem [resolvable:$true] %s238
      %241 = dma.vmem_to_hbm [thread:$0]  %s239, 16, %s3, [#allocation6]
    $region33: #{tpu_custom_call.1} parent=1 // pred_fallthru
      _
    // Predicated region
    $region34: #{tpu_custom_call.1} parent=1 // pred_check
      _
    $region35: #{tpu_custom_call.1} parent=1 // pred_check_branch
      %243 = sbr.rel (0) target = $region37
    $region36: #{tpu_custom_call.1} parent=1 // pred_region
      %244 = dma.done [#allocation6], 16
    $region37: #{tpu_custom_call.1} parent=1 // pred_fallthru
      _
    %245 = vsyncpa [#allocation5], 1
    %246 = vsyncpa [#allocation8], 1
    %247 = vsyncpa [#allocation6], 1

</llo_original>
